<compile_context>
chip_gen: v7x
topology: tpu7x:2x2x1
jax: 0.10.0
libtpu: 0.0.40
codegen_flags: <defaults>
</compile_context>

<pallas_src>
import jax
import jax.numpy as jnp
from jax.experimental import pallas as pl
from jax.experimental.pallas import tpu as pltpu

LANE = 128
SUBLANE = 8


def _round_up(x, m):
    return (x + m - 1) // m * m


def make_critic_kernel(n_hidden):
    """Kernel closing over the (static) number of hidden layers.

    ref order: state, action, w_s, w_a, b_in,
               [w_h0, b_h0, ..., w_h{n-1}, b_h{n-1}],
               w_out8, b_out (SMEM scalar), out
    """

    def kernel(*refs):
        state_ref, action_ref = refs[0], refs[1]
        w_s_ref, w_a_ref, b_in_ref = refs[2], refs[3], refs[4]
        w_out_ref = refs[5 + 2 * n_hidden]      # (8, h_pad); row 0 = w_out, rows 1..7 zero
        b_out_ref = refs[6 + 2 * n_hidden]      # (1,) f32 scalar in SMEM
        o_ref = refs[7 + 2 * n_hidden]          # (1, tb) packed lane-dense output block

        # Input layer: split matmul replaces the host-side concat(state, action).
        # Operands are cast to the (possibly bf16) weight dtype; accumulation stays f32.
        wdt = w_s_ref.dtype
        h = jnp.dot(state_ref[...].astype(wdt), w_s_ref[...],
                    preferred_element_type=jnp.float32)
        h = h + jnp.dot(action_ref[...].astype(wdt), w_a_ref[...],
                        preferred_element_type=jnp.float32)
        h = jnp.maximum(h + b_in_ref[...], 0.0)

        # Static Python loop: n_hidden is a compile-time constant.
        for i in range(n_hidden):
            w_ref = refs[5 + 2 * i]
            b_ref = refs[6 + 2 * i]
            h = jnp.dot(h.astype(w_ref.dtype), w_ref[...],
                        preferred_element_type=jnp.float32)
            h = jnp.maximum(h + b_ref[...], 0.0)

        # Final Linear(H, 1), emitted directly in packed lane-dense layout:
        #   rows[0, c] = sum_k w_out[k] * h[c, k]
        # i.e. one MXU matmul against h^T. The batch index lands on the lane axis, so the
        # store is a full-width unmasked vst and the output array is only (1, B_pad) f32.
        rows = jnp.dot(w_out_ref[...], h.astype(w_out_ref.dtype).T,
                       preferred_element_type=jnp.float32)          # (8, tb)
        o_ref[...] = (rows[0:1, :] + b_out_ref[0]).astype(o_ref.dtype)

    return kernel


def _choose_tiling(B, tile_b):
    """Pick (B_pad, tb): tb multiple of 128 (lane-dense packed out + MXU-friendly) except for
    tiny single-step batches; prefer the largest tile <= tile_b that still yields >= 2 grid
    steps (keeps both v7x TensorCores busy) while minimizing host-side padding."""
    tile_b = max(int(tile_b), LANE)
    if B < 2 * LANE:
        b_pad = _round_up(B, SUBLANE)
        return b_pad, b_pad                     # one grid step; blocks == full arrays
    b_pad = _round_up(B, LANE)                  # worst-case pad < 128 rows (often zero)
    for tb in (1024, 896, 768, 640, 512, 384, 256, 128):
        if tb <= tile_b and b_pad % tb == 0 and b_pad // tb >= 2:
            return b_pad, tb
    return b_pad, LANE                          # unreachable guard (tile_b >= 128)


def critic_forward(state, action, kparams, *, tile_b=1024):
    """Pallas forward pass of CriticNet. Returns (B, 1) value predictions."""
    B, state_dim = state.shape
    action_dim = action.shape[1]
    n_hidden = len(kparams["hidden"])
    h_pad = kparams["w_s"].shape[1]

    B_pad, tb = _choose_tiling(B, tile_b)
    if B_pad != B:
        pad = B_pad - B
        state = jnp.pad(state, ((0, pad), (0, 0)))
        action = jnp.pad(action, ((0, pad), (0, 0)))

    flat = [kparams["w_s"], kparams["w_a"], kparams["b_in"]]
    for w, b in kparams["hidden"]:
        flat += [w, b]
    flat.append(kparams["w_out8"])

    weight_bytes = sum(int(a.size) * a.dtype.itemsize for a in flat)
    # Weights never change across the batch grid; once they are big enough to matter,
    # single-buffer them (halves resident weight VMEM; they are fetched exactly once).
    single_buffer_weights = weight_bytes >= (4 << 20)

    grid = (B_pad // tb,)

    in_specs = [
        pl.BlockSpec((tb, state_dim), lambda i: (i, 0)),
        pl.BlockSpec((tb, action_dim), lambda i: (i, 0)),
    ]
    for arr in flat:
        if single_buffer_weights:
            in_specs.append(pl.BlockSpec(arr.shape, lambda i: (0, 0),
                                         pipeline_mode=pl.Buffered(1)))
        else:
            in_specs.append(pl.BlockSpec(arr.shape, lambda i: (0, 0)))
    # Scalar output bias lives in SMEM.
    in_specs.append(pl.BlockSpec(memory_space=pltpu.MemorySpace.SMEM))

    out_specs = pl.BlockSpec((1, tb), lambda i: (0, i))

    # Explicit scoped-VMEM budget: resident weights (x1 or x2 buffers) + double-buffered
    # I/O blocks + headroom for f32 activations, clamped to [32 MiB, 64 MiB] (v7x physical).
    wbuf = 1 if single_buffer_weights else 2
    io_bytes = 2 * (tb * (state_dim + action_dim) * 4 + tb * 4)
    act_bytes = 4 * tb * h_pad * 4
    est = weight_bytes * wbuf + io_bytes + act_bytes + (2 << 20)
    vmem_limit = int(min(64 << 20, max(32 << 20, est)))

    out = pl.pallas_call(
        make_critic_kernel(n_hidden),
        out_shape=jax.ShapeDtypeStruct((1, B_pad), jnp.float32),
        grid=grid,
        in_specs=in_specs,
        out_specs=out_specs,
        compiler_params=pltpu.CompilerParams(
            dimension_semantics=("parallel",),
            vmem_limit_bytes=vmem_limit,
        ),
    )(state, action, *flat, kparams["b_out"])

    return out[0, :B].reshape(B, 1)  # (B, 1), matching the PyTorch module


def prepare_params(params, state_dim, action_dim, use_bf16=None):
    """One-time host-side prep: pad hidden width to 128 lanes, split w_in so the kernel never
    needs a concat, and build the packed-output weight row. Zero padding keeps results exact.
    Weights are cast to bf16 (f32 accumulation in-kernel) only when the hidden width is large
    enough for the MXU / DMA savings to matter."""
    hidden = params["w_in"].shape[1]
    h_pad = _round_up(hidden, LANE)
    if use_bf16 is None:
        use_bf16 = h_pad >= 512        # neutral for tiny H; big win (all gens) for large H
    wdt = jnp.bfloat16 if use_bf16 else jnp.float32

    def pad_cols(a):
        return jnp.pad(a, ((0, 0), (0, h_pad - a.shape[1])))

    def pad_rows(a):
        return jnp.pad(a, ((0, h_pad - a.shape[0]), (0, 0)))

    w_in = params["w_in"]                                             # (state+action, hidden)
    w_s = pad_cols(w_in[:state_dim]).astype(wdt)                      # (state_dim, h_pad)
    w_a = pad_cols(w_in[state_dim:state_dim + action_dim]).astype(wdt)  # (action_dim, h_pad)
    b_in = pad_cols(params["b_in"]).astype(jnp.float32)               # (1, h_pad)

    hidden_layers = [(pad_cols(pad_rows(w)).astype(wdt),
                      pad_cols(b).astype(jnp.float32))
                     for w, b in params["hidden"]]

    w_out_t = pad_cols(params["w_out"].T)                             # (1, h_pad)
    w_out8 = jnp.pad(w_out_t, ((0, 7), (0, 0))).astype(wdt)           # (8, h_pad), rows 1..7 zero
    b_out = params["b_out"].reshape(-1)[:1].astype(jnp.float32)       # (1,) SMEM scalar

    return {"w_s": w_s, "w_a": w_a, "b_in": b_in,
            "hidden": hidden_layers,
            "w_out8": w_out8, "b_out": b_out}


def init_params(key, state_dim, action_dim, hidden_size, n_hidden):
    """Deterministic xavier-uniform-ish init (mirrors weights_init_ semantics); small random
    biases so the bias-add paths are actually exercised by the self-check."""

    def linear(key, fan_in, fan_out):
        kw, kb = jax.random.split(key)
        limit = (6.0 / (fan_in + fan_out)) ** 0.5
        w = jax.random.uniform(kw, (fan_in, fan_out), jnp.float32, -limit, limit)
        b = jax.random.uniform(kb, (1, fan_out), jnp.float32, -0.05, 0.05)
        return w, b

    keys = jax.random.split(key, n_hidden + 2)
    w_in, b_in = linear(keys[0], state_dim + action_dim, hidden_size)
    hidden = [linear(keys[1 + i], hidden_size, hidden_size) for i in range(n_hidden)]
    w_out, b_out = linear(keys[-1], hidden_size, 1)
    return {"w_in": w_in, "b_in": b_in, "hidden": hidden,
            "w_out": w_out, "b_out": b_out}


def reference_forward(state, action, params):
    x = jnp.concatenate([state, action], axis=-1)
    h = jax.nn.relu(x @ params["w_in"] + params["b_in"])
    for w, b in params["hidden"]:
        h = jax.nn.relu(h @ w + b)
    return h @ params["w_out"] + params["b_out"]


if __name__ == "__main__":
    state_dim, action_dim, hidden_size, n_hidden = 16, 8, 32, 2

    key = jax.random.PRNGKey(0)
    k_params, k_s1, k_a1, k_s2, k_a2 = jax.random.split(key, 5)

    params = init_params(k_params, state_dim, action_dim, hidden_size, n_hidden)
    kparams = prepare_params(params, state_dim, action_dim)

    # Small batch: single grid step (block == full arrays).
    batch = 16
    state = jax.random.normal(k_s1, (batch, state_dim), jnp.float32)
    action = jax.random.normal(k_a1, (batch, action_dim), jnp.float32)
    val_pred = jax.block_until_ready(critic_forward(state, action, kparams))
    ref = reference_forward(state, action, params)
    assert val_pred.shape == (batch, 1)
    assert jnp.allclose(val_pred, ref, atol=1e-4, rtol=1e-4)

    # Larger batch: exercises the multi-step grid (2 x 256-row tiles) and packed output path.
    batch2 = 512
    state2 = jax.random.normal(k_s2, (batch2, state_dim), jnp.float32)
    action2 = jax.random.normal(k_a2, (batch2, action_dim), jnp.float32)
    val_pred2 = jax.block_until_ready(critic_forward(state2, action2, kparams))
    ref2 = reference_forward(state2, action2, params)
    assert val_pred2.shape == (batch2, 1)
    assert jnp.allclose(val_pred2, ref2, atol=1e-4, rtol=1e-4)

    print("KERNEL_OK")
</pallas_src>

<mosaic_0001>
module attributes {stable_mosaic.version = 11 : i64} {
  func.func @kernel(%arg0: i32, %arg1: memref<16x16xf32, #tpu.memory_space<vmem>>, %arg2: memref<16x8xf32, #tpu.memory_space<vmem>>, %arg3: memref<16x128xf32, #tpu.memory_space<vmem>>, %arg4: memref<8x128xf32, #tpu.memory_space<vmem>>, %arg5: memref<1x128xf32, #tpu.memory_space<vmem>>, %arg6: memref<128x128xf32, #tpu.memory_space<vmem>>, %arg7: memref<1x128xf32, #tpu.memory_space<vmem>>, %arg8: memref<128x128xf32, #tpu.memory_space<vmem>>, %arg9: memref<1x128xf32, #tpu.memory_space<vmem>>, %arg10: memref<8x128xf32, #tpu.memory_space<vmem>>, %arg11: memref<1xf32, #tpu.memory_space<smem>>, %arg12: memref<1x16xf32, #tpu.memory_space<vmem>>) attributes {dimension_semantics = [#tpu.dimension_semantics<parallel>], iteration_bounds = array<i64: 1>, scalar_prefetch = 0 : i64, scratch_operands = 0 : i64, tpu.core_type = #tpu.core_type<tc>, window_params = [{transform_indices = @transform_0, window_bounds = array<i64: 16, 16>}, {transform_indices = @transform_1, window_bounds = array<i64: 16, 8>}, {pipeline_mode = #tpu.pipeline_mode<synchronous>, transform_indices = @transform_2, window_bounds = array<i64: 16, 128>}, {pipeline_mode = #tpu.pipeline_mode<synchronous>, transform_indices = @transform_3, window_bounds = array<i64: 8, 128>}, {pipeline_mode = #tpu.pipeline_mode<synchronous>, transform_indices = @transform_4, window_bounds = array<i64: 1, 128>}, {pipeline_mode = #tpu.pipeline_mode<synchronous>, transform_indices = @transform_5, window_bounds = array<i64: 128, 128>}, {pipeline_mode = #tpu.pipeline_mode<synchronous>, transform_indices = @transform_6, window_bounds = array<i64: 1, 128>}, {pipeline_mode = #tpu.pipeline_mode<synchronous>, transform_indices = @transform_7, window_bounds = array<i64: 128, 128>}, {pipeline_mode = #tpu.pipeline_mode<synchronous>, transform_indices = @transform_8, window_bounds = array<i64: 1, 128>}, {pipeline_mode = #tpu.pipeline_mode<synchronous>, transform_indices = @transform_9, window_bounds = array<i64: 8, 128>}, {transform_indices = @transform_10, window_bounds = array<i64: 1>}, {transform_indices = @transform_11, window_bounds = array<i64: 1, 16>}]} {
    %c0 = arith.constant 0 : index
    %c0_0 = arith.constant 0 : index
    %0 = vector.load %arg1[%c0, %c0_0] : memref<16x16xf32, #tpu.memory_space<vmem>>, vector<16x16xf32>
    %c0_1 = arith.constant 0 : index
    %c0_2 = arith.constant 0 : index
    %1 = vector.load %arg3[%c0_1, %c0_2] : memref<16x128xf32, #tpu.memory_space<vmem>>, vector<16x128xf32>
    %cst = arith.constant dense<0.000000e+00> : vector<16x128xf32>
    %2 = tpu.matmul %0, %1, %cst {dimension_numbers = #tpu.dot_dimension_numbers<[1], [0], [0], [1], [0, 0, 1, 1], [], []>} : vector<16x16xf32>, vector<16x128xf32>, vector<16x128xf32> -> vector<16x128xf32>
    %c0_3 = arith.constant 0 : index
    %c0_4 = arith.constant 0 : index
    %3 = vector.load %arg2[%c0_3, %c0_4] : memref<16x8xf32, #tpu.memory_space<vmem>>, vector<16x8xf32>
    %c0_5 = arith.constant 0 : index
    %c0_6 = arith.constant 0 : index
    %4 = vector.load %arg4[%c0_5, %c0_6] : memref<8x128xf32, #tpu.memory_space<vmem>>, vector<8x128xf32>
    %cst_7 = arith.constant dense<0.000000e+00> : vector<16x128xf32>
    %5 = tpu.matmul %3, %4, %cst_7 {dimension_numbers = #tpu.dot_dimension_numbers<[1], [0], [0], [1], [0, 0, 1, 1], [], []>} : vector<16x8xf32>, vector<8x128xf32>, vector<16x128xf32> -> vector<16x128xf32>
    %6 = arith.addf %2, %5 : vector<16x128xf32>
    %c0_8 = arith.constant 0 : index
    %c0_9 = arith.constant 0 : index
    %7 = vector.load %arg5[%c0_8, %c0_9] : memref<1x128xf32, #tpu.memory_space<vmem>>, vector<1x128xf32>
    %8 = vector.broadcast %7 : vector<1x128xf32> to vector<16x128xf32>
    %9 = arith.addf %6, %8 : vector<16x128xf32>
    %cst_10 = arith.constant 0.000000e+00 : f32
    %10 = vector.broadcast %cst_10 : f32 to vector<16x128xf32>
    %11 = arith.maximumf %9, %10 : vector<16x128xf32>
    %c0_11 = arith.constant 0 : index
    %c0_12 = arith.constant 0 : index
    %12 = vector.load %arg6[%c0_11, %c0_12] : memref<128x128xf32, #tpu.memory_space<vmem>>, vector<128x128xf32>
    %cst_13 = arith.constant dense<0.000000e+00> : vector<16x128xf32>
    %13 = tpu.matmul %11, %12, %cst_13 {dimension_numbers = #tpu.dot_dimension_numbers<[1], [0], [0], [1], [0, 0, 1, 1], [], []>} : vector<16x128xf32>, vector<128x128xf32>, vector<16x128xf32> -> vector<16x128xf32>
    %c0_14 = arith.constant 0 : index
    %c0_15 = arith.constant 0 : index
    %14 = vector.load %arg7[%c0_14, %c0_15] : memref<1x128xf32, #tpu.memory_space<vmem>>, vector<1x128xf32>
    %15 = vector.broadcast %14 : vector<1x128xf32> to vector<16x128xf32>
    %16 = arith.addf %13, %15 : vector<16x128xf32>
    %cst_16 = arith.constant 0.000000e+00 : f32
    %17 = vector.broadcast %cst_16 : f32 to vector<16x128xf32>
    %18 = arith.maximumf %16, %17 : vector<16x128xf32>
    %c0_17 = arith.constant 0 : index
    %c0_18 = arith.constant 0 : index
    %19 = vector.load %arg8[%c0_17, %c0_18] : memref<128x128xf32, #tpu.memory_space<vmem>>, vector<128x128xf32>
    %cst_19 = arith.constant dense<0.000000e+00> : vector<16x128xf32>
    %20 = tpu.matmul %18, %19, %cst_19 {dimension_numbers = #tpu.dot_dimension_numbers<[1], [0], [0], [1], [0, 0, 1, 1], [], []>} : vector<16x128xf32>, vector<128x128xf32>, vector<16x128xf32> -> vector<16x128xf32>
    %c0_20 = arith.constant 0 : index
    %c0_21 = arith.constant 0 : index
    %21 = vector.load %arg9[%c0_20, %c0_21] : memref<1x128xf32, #tpu.memory_space<vmem>>, vector<1x128xf32>
    %22 = vector.broadcast %21 : vector<1x128xf32> to vector<16x128xf32>
    %23 = arith.addf %20, %22 : vector<16x128xf32>
    %cst_22 = arith.constant 0.000000e+00 : f32
    %24 = vector.broadcast %cst_22 : f32 to vector<16x128xf32>
    %25 = arith.maximumf %23, %24 : vector<16x128xf32>
    %c0_23 = arith.constant 0 : index
    %c0_24 = arith.constant 0 : index
    %26 = vector.load %arg10[%c0_23, %c0_24] : memref<8x128xf32, #tpu.memory_space<vmem>>, vector<8x128xf32>
    %27 = tpu.transpose %25, [1, 0] : vector<16x128xf32> -> vector<128x16xf32>
    %cst_25 = arith.constant dense<0.000000e+00> : vector<8x16xf32>
    %28 = tpu.matmul %26, %27, %cst_25 {dimension_numbers = #tpu.dot_dimension_numbers<[1], [0], [0], [1], [0, 0, 1, 1], [], []>} : vector<8x128xf32>, vector<128x16xf32>, vector<8x16xf32> -> vector<8x16xf32>
    %29 = vector.extract_strided_slice %28 {offsets = [0, 0], sizes = [1, 16], strides = [1, 1]} : vector<8x16xf32> to vector<1x16xf32>
    %c0_26 = arith.constant 0 : index
    %30 = memref.load %arg11[%c0_26] : memref<1xf32, #tpu.memory_space<smem>>
    %31 = vector.broadcast %30 : f32 to vector<1x16xf32>
    %32 = arith.addf %29, %31 : vector<1x16xf32>
    %c0_27 = arith.constant 0 : index
    %c0_28 = arith.constant 0 : index
    %33 = vector.load %arg12[%c0_27, %c0_28] : memref<1x16xf32, #tpu.memory_space<vmem>>, vector<1x16xf32>
    tpu.vector_store %arg12[%c0_27, %c0_28], %32 {strides = array<i32>} : memref<1x16xf32, #tpu.memory_space<vmem>>, vector<1x16xf32>,
    return
  }
  func.func @transform_0(%arg0: i32) -> (i32, i32) {
    %c0_i32 = arith.constant 0 : i32
    %c0_i32_0 = arith.constant 0 : i32
    return %arg0, %c0_i32 : i32, i32
  }
  func.func @transform_1(%arg0: i32) -> (i32, i32) {
    %c0_i32 = arith.constant 0 : i32
    %c0_i32_0 = arith.constant 0 : i32
    return %arg0, %c0_i32 : i32, i32
  }
  func.func @transform_2(%arg0: i32) -> (i32, i32) {
    %c0_i32 = arith.constant 0 : i32
    %c0_i32_0 = arith.constant 0 : i32
    %c0_i32_1 = arith.constant 0 : i32
    return %c0_i32, %c0_i32_0 : i32, i32
  }
  func.func @transform_3(%arg0: i32) -> (i32, i32) {
    %c0_i32 = arith.constant 0 : i32
    %c0_i32_0 = arith.constant 0 : i32
    %c0_i32_1 = arith.constant 0 : i32
    return %c0_i32, %c0_i32_0 : i32, i32
  }
  func.func @transform_4(%arg0: i32) -> (i32, i32) {
    %c0_i32 = arith.constant 0 : i32
    %c0_i32_0 = arith.constant 0 : i32
    %c0_i32_1 = arith.constant 0 : i32
    return %c0_i32, %c0_i32_0 : i32, i32
  }
  func.func @transform_5(%arg0: i32) -> (i32, i32) {
    %c0_i32 = arith.constant 0 : i32
    %c0_i32_0 = arith.constant 0 : i32
    %c0_i32_1 = arith.constant 0 : i32
    return %c0_i32, %c0_i32_0 : i32, i32
  }
  func.func @transform_6(%arg0: i32) -> (i32, i32) {
    %c0_i32 = arith.constant 0 : i32
    %c0_i32_0 = arith.constant 0 : i32
    %c0_i32_1 = arith.constant 0 : i32
    return %c0_i32, %c0_i32_0 : i32, i32
  }
  func.func @transform_7(%arg0: i32) -> (i32, i32) {
    %c0_i32 = arith.constant 0 : i32
    %c0_i32_0 = arith.constant 0 : i32
    %c0_i32_1 = arith.constant 0 : i32
    return %c0_i32, %c0_i32_0 : i32, i32
  }
  func.func @transform_8(%arg0: i32) -> (i32, i32) {
    %c0_i32 = arith.constant 0 : i32
    %c0_i32_0 = arith.constant 0 : i32
    %c0_i32_1 = arith.constant 0 : i32
    return %c0_i32, %c0_i32_0 : i32, i32
  }
  func.func @transform_9(%arg0: i32) -> (i32, i32) {
    %c0_i32 = arith.constant 0 : i32
    %c0_i32_0 = arith.constant 0 : i32
    %c0_i32_1 = arith.constant 0 : i32
    return %c0_i32, %c0_i32_0 : i32, i32
  }
  func.func @transform_10(%arg0: i32) -> i32 {
    %c0_i32 = arith.constant 0 : i32
    %c0_i32_0 = arith.constant 0 : i32
    return %c0_i32 : i32
  }
  func.func @transform_11(%arg0: i32) -> (i32, i32) {
    %c0_i32 = arith.constant 0 : i32
    %c0_i32_0 = arith.constant 0 : i32
    return %c0_i32, %arg0 : i32, i32
  }
}

</mosaic_0001>

<llo_original>
// kernel: tpu_custom_call.1
$region0: #{tpu_custom_call.1}
  #allocation0 [shape = 'u32[]', space=smem, size = 0x4, offset = 0x4, fixed_abs, tag = 'smem constant byte address 0x4 - core index']
  #allocation1 [shape = 'u32[144,128]{1,0:T(1,128)}', space=vmem, size = 0x12000, scoped, tag = 'internal scratch']
  #allocation2 [shape = 'f32[1]{0:T(128)S(6)}', space=smem, size = 0x200, scoped, tag = 'scoped memory for tpu_custom_call.1']
  %s0 = inlined_call_operand.vmem [shape: f32[16,16], index: 0, kind: input, shape index: {}]
  %s1 = inlined_call_operand.vmem [shape: f32[16,8], index: 1, kind: input, shape index: {}]
  %s2 = inlined_call_operand.vmem [shape: f32[16,128], index: 2, kind: input, shape index: {}]
  %s3 = inlined_call_operand.hbm [shape: f32[8,128], index: 3, kind: input, shape index: {}]
  %s4 = inlined_call_operand.vmem [shape: f32[1,128], index: 4, kind: input, shape index: {}]
  %s5 = inlined_call_operand.hbm [shape: f32[128,128], index: 5, kind: input, shape index: {}]
  %s6 = inlined_call_operand.vmem [shape: f32[1,128], index: 6, kind: input, shape index: {}]
  %s7 = inlined_call_operand.hbm [shape: f32[128,128], index: 7, kind: input, shape index: {}]
  %s8 = inlined_call_operand.vmem [shape: f32[1,128], index: 8, kind: input, shape index: {}]
  %s9 = inlined_call_operand.vmem [shape: f32[8,128], index: 9, kind: input, shape index: {}]
  %s10 = inlined_call_operand.<no memory space> [shape: f32[1], index: 10, kind: input, shape index: {}]
  %s11 = inlined_call_operand.hbm [shape: f32[1,16], index: 11, kind: output, shape index: {}]
  %s12 = sld [smem:[#allocation0]]
  $region66: #{tpu_custom_call.1} parent=0
    _
  %s14 = ssub.s32 1, %s12
  %s15 = scalar_select 0, %s14, %s12
  %16 = sst [smem:[#allocation2]] %s10
  $region1: #{tpu_custom_call.1} parent=0
    #allocation3 [shape = 'u8[4096]{0}', space=vmem, size = 0x1000, scoped, tag = 'input window, operand 3, single buffered']
    #allocation4 [shape = 's32[1]{0}', space=sflag, size = 0x4, scoped, tag = 'scoped memory for tpu_custom_call.1']
    #allocation5 [shape = 's32[1]{0}', space=sflag, size = 0x4, scoped, tag = 'scoped memory for tpu_custom_call.1']
    #allocation6 [shape = 'u8[65536]{0}', space=vmem, size = 0x10000, scoped, tag = 'input window, operand 5, single buffered']
    #allocation7 [shape = 's32[1]{0}', space=sflag, size = 0x4, scoped, tag = 'scoped memory for tpu_custom_call.1']
    #allocation8 [shape = 'u8[65536]{0}', space=vmem, size = 0x10000, scoped, tag = 'input window, operand 7, single buffered']
    #allocation9 [shape = 'u8[512]{0}', space=vmem, size = 0x400, scoped, tag = 'output window, operand 0, single buffered']
    %17 = vsyncpa [#allocation4], 0
    %18 = vsyncpa [#allocation7], 0
    %19 = vsyncpa [#allocation5], 0
    // Predicated region
    $region2: #{tpu_custom_call.1} parent=1 // pred_check
      _
    $region3: #{tpu_custom_call.1} parent=1 // pred_check_branch
      %21 = sbr.rel (0) target = $region5
    $region4: #{tpu_custom_call.1} parent=1 // pred_region
      _
    $region5: #{tpu_custom_call.1} parent=1 // pred_fallthru
      _
    // Predicated region
    $region6: #{tpu_custom_call.1} parent=1 // pred_check
      _
    $region7: #{tpu_custom_call.1} parent=1 // pred_check_branch
      %23 = sbr.rel (0) target = $region9
    $region8: #{tpu_custom_call.1} parent=1 // pred_region
      _
    $region9: #{tpu_custom_call.1} parent=1 // pred_fallthru
      _
    // Predicated region
    $region10: #{tpu_custom_call.1} parent=1 // pred_check
      _
    $region11: #{tpu_custom_call.1} parent=1 // pred_check_branch
      %25 = sbr.rel (0) target = $region13
    $region12: #{tpu_custom_call.1} parent=1 // pred_region
      _
    $region13: #{tpu_custom_call.1} parent=1 // pred_fallthru
      _
    // Predicated region
    $region14: #{tpu_custom_call.1} parent=1 // pred_check
      _
    $region15: #{tpu_custom_call.1} parent=1 // pred_check_branch
      %27 = sbr.rel (0) target = $region17
    $region16: #{tpu_custom_call.1} parent=1 // pred_region
      %s29 = ssub.s32 128, 128
      %30 = vsyncadd [#allocation4], %s29
      %s32 = sshll.u32 [#allocation3], 4
      %s33 = int_to_ptr.vmem [resolvable:$true] %s32
      %35 = dma.hbm_to_vmem [thread:$0]  %s3, 128, %s33, [#allocation4]
    $region17: #{tpu_custom_call.1} parent=1 // pred_fallthru
      _
    // Predicated region
    $region18: #{tpu_custom_call.1} parent=1 // pred_check
      _
    $region19: #{tpu_custom_call.1} parent=1 // pred_check_branch
      %37 = sbr.rel (0) target = $region21
    $region20: #{tpu_custom_call.1} parent=1 // pred_region
      _
    $region21: #{tpu_custom_call.1} parent=1 // pred_fallthru
      _
    // Predicated region
    $region22: #{tpu_custom_call.1} parent=1 // pred_check
      _
    $region23: #{tpu_custom_call.1} parent=1 // pred_check_branch
      %39 = sbr.rel (0) target = $region25
    $region24: #{tpu_custom_call.1} parent=1 // pred_region
      %s41 = ssub.s32 2048, 2048
      %42 = vsyncadd [#allocation7], %s41
      %s43 = sshll.u32 [#allocation6], 4
      %s44 = int_to_ptr.vmem [resolvable:$true] %s43
      %49 = dma.hbm_to_vmem [thread:$0]  %s5, 2048, %s44, [#allocation7], 128, 128, 8
    $region25: #{tpu_custom_call.1} parent=1 // pred_fallthru
      _
    // Predicated region
    $region26: #{tpu_custom_call.1} parent=1 // pred_check
      _
    $region27: #{tpu_custom_call.1} parent=1 // pred_check_branch
      %51 = sbr.rel (0) target = $region29
    $region28: #{tpu_custom_call.1} parent=1 // pred_region
      _
    $region29: #{tpu_custom_call.1} parent=1 // pred_fallthru
      _
    // Predicated region
    $region30: #{tpu_custom_call.1} parent=1 // pred_check
      _
    $region31: #{tpu_custom_call.1} parent=1 // pred_check_branch
      %53 = sbr.rel (0) target = $region33
    $region32: #{tpu_custom_call.1} parent=1 // pred_region
      %s55 = ssub.s32 2048, 2048
      %56 = vsyncadd [#allocation7], %s55
      %s57 = sshll.u32 [#allocation8], 4
      %s58 = int_to_ptr.vmem [resolvable:$true] %s57
      %63 = dma.hbm_to_vmem [thread:$0]  %s7, 2048, %s58, [#allocation7], 128, 128, 8
    $region33: #{tpu_custom_call.1} parent=1 // pred_fallthru
      _
    // Predicated region
    $region34: #{tpu_custom_call.1} parent=1 // pred_check
      _
    $region35: #{tpu_custom_call.1} parent=1 // pred_check_branch
      %65 = sbr.rel (0) target = $region37
    $region36: #{tpu_custom_call.1} parent=1 // pred_region
      _
    $region37: #{tpu_custom_call.1} parent=1 // pred_fallthru
      _
    // Predicated region
    $region38: #{tpu_custom_call.1} parent=1 // pred_check
      _
    $region39: #{tpu_custom_call.1} parent=1 // pred_check_branch
      %67 = sbr.rel (0) target = $region41
    $region40: #{tpu_custom_call.1} parent=1 // pred_region
      _
    $region41: #{tpu_custom_call.1} parent=1 // pred_fallthru
      _
    // Predicated region
    $region42: #{tpu_custom_call.1} parent=1 // pred_check
      _
    $region43: #{tpu_custom_call.1} parent=1 // pred_check_branch
      %69 = sbr.rel (0) target = $region45
    $region44: #{tpu_custom_call.1} parent=1 // pred_region
      _
    $region45: #{tpu_custom_call.1} parent=1 // pred_fallthru
      _
    // Predicated region
    $region46: #{tpu_custom_call.1} parent=1 // pred_check
      _
    $region47: #{tpu_custom_call.1} parent=1 // pred_check_branch
      %71 = sbr.rel (0) target = $region49
    $region48: #{tpu_custom_call.1} parent=1 // pred_region
      %72 = dma.done [#allocation4], 128
    $region49: #{tpu_custom_call.1} parent=1 // pred_fallthru
      _
    // Predicated region
    $region50: #{tpu_custom_call.1} parent=1 // pred_check
      _
    $region51: #{tpu_custom_call.1} parent=1 // pred_check_branch
      %74 = sbr.rel (0) target = $region53
    $region52: #{tpu_custom_call.1} parent=1 // pred_region
      %75 = dma.done [#allocation7], 2048
    $region53: #{tpu_custom_call.1} parent=1 // pred_fallthru
      _
    // Predicated region
    $region54: #{tpu_custom_call.1} parent=1 // pred_check
      _
    $region55: #{tpu_custom_call.1} parent=1 // pred_check_branch
      %77 = sbr.rel (0) target = $region57
    $region56: #{tpu_custom_call.1} parent=1 // pred_region
      %78 = dma.done [#allocation7], 2048
    $region57: #{tpu_custom_call.1} parent=1 // pred_fallthru
      _
    %v79 = vld [vmem:[%s0] sm:$0xff]
    %v80 = vld [vmem:[%s0 + $0x8] sm:$0xff]
    %v81 = vld [vmem:[%s2] sm:$0xff]
    %v82 = vld [vmem:[%s2 + $0x8] sm:$0xff]
    %v83 = vld [vmem:[%s1] sm:$0xff]
    %v84 = vld [vmem:[%s1 + $0x8] sm:$0xff]
    %v85 = vld [vmem:[#allocation3] sm:$0xff]
    %vm86 = vcmask 64512
    %v88 = vsel %vm86, %v83, 0
    %v91 = vsel %vm86, %v84, 0
    %93 = vmatprep.subr.mxu0 0.0
    %94 = vmatpush1.msra.mxu0 %v85
    %95 = vmatprep.subr.mxu0 0.0
    %96 = vmatpush1.msra.mxu0 0.0
    %97 = vmatprep.subr.mxu0 0.0
    %98 = vmatpush1.msra.mxu0 0.0
    %99 = vmatprep.subr.mxu0 0.0
    %100 = vmatpush1.msra.mxu0 0.0
    %101 = vmatprep.subr.mxu0 0.0
    %102 = vmatpush1.msra.mxu0 0.0
    %103 = vmatprep.subr.mxu0 0.0
    %104 = vmatpush1.msra.mxu0 0.0
    %105 = vmatprep.subr.mxu0 0.0
    %106 = vmatpush1.msra.mxu0 0.0
    %107 = vmatprep.subr.mxu0 0.0
    %108 = vmatpush1.msra.mxu0 0.0
    %109 = vmatprep.subr.mxu0 0.0
    %110 = vmatpush1.msra.mxu0 0.0
    %111 = vmatprep.subr.mxu0 0.0
    %112 = vmatpush1.msra.mxu0 0.0
    %113 = vmatprep.subr.mxu0 0.0
    %114 = vmatpush1.msra.mxu0 0.0
    %115 = vmatprep.subr.mxu0 0.0
    %116 = vmatpush1.msra.mxu0 0.0
    %117 = vmatprep.subr.mxu0 0.0
    %118 = vmatpush1.msra.mxu0 0.0
    %119 = vmatprep.subr.mxu0 0.0
    %120 = vmatpush1.msra.mxu0 0.0
    %121 = vmatprep.subr.mxu0 0.0
    %122 = vmatpush1.msra.mxu0 0.0
    %123 = vmatprep.subr.mxu0 0.0
    %124 = vmatpush1.msra.mxu0 0.0
    %125 = vmatprep.subr.mxu0 0.0
    %126 = vmatpush1.msra.mxu0 0.0
    %127 = vmatprep.subr.mxu0 0.0
    %128 = vmatpush1.msra.mxu0 0.0
    %129 = vmatprep.subr.mxu0 0.0
    %130 = vmatpush1.msra.mxu0 0.0
    %131 = vmatprep.subr.mxu0 0.0
    %132 = vmatpush1.msra.mxu0 0.0
    %133 = vmatprep.subr.mxu0 0.0
    %134 = vmatpush1.msra.mxu0 0.0
    %135 = vmatprep.subr.mxu0 0.0
    %136 = vmatpush1.msra.mxu0 0.0
    %137 = vmatprep.subr.mxu0 0.0
    %138 = vmatpush1.msra.mxu0 0.0
    %139 = vmatprep.subr.mxu0 0.0
    %140 = vmatpush1.msra.mxu0 0.0
    %141 = vmatprep.subr.mxu0 0.0
    %142 = vmatpush1.msra.mxu0 0.0
    %143 = vmatprep.subr.mxu0 0.0
    %144 = vmatpush1.msra.mxu0 0.0
    %145 = vmatprep.subr.mxu0 0.0
    %146 = vmatpush1.msra.mxu0 0.0
    %147 = vmatprep.subr.mxu0 0.0
    %148 = vmatpush1.msra.mxu0 0.0
    %149 = vmatprep.subr.mxu0 0.0
    %150 = vmatpush1.msra.mxu0 0.0
    %151 = vmatprep.subr.mxu0 0.0
    %152 = vmatpush1.msra.mxu0 0.0
    %153 = vmatprep.subr.mxu0 0.0
    %154 = vmatpush1.msra.mxu0 0.0
    %155 = vmatprep.subr.mxu0 0.0
    %156 = vmatpush1.msra.mxu0 0.0
    %157 = vmatprep.mubr.f32.mxu0 0.0
    %158 = vmatmul.mubr.f32.gmra.mrb[0].mxu0 %v88
    %v159 = vpop.f32.mrb[0].mxu0
    %v160 = vadd.f32 0.0, %v159
    %v161 = vpop.f32.mrb[0].mxu0
    %162 = vmatprep.mubr.f32.mxu0 0.0
    %163 = vmatmul.mubr.f32.gmra.mrb[0].mxu0 %v91
    %v164 = vpop.f32.mrb[0].mxu0
    %v165 = vadd.f32 0.0, %v164
    %v166 = vpop.f32.mrb[0].mxu0
    %167 = vdwg.mxu0
    %vm168 = vcmask 130048
    %v170 = vsel %vm168, %v79, 0
    %v173 = vsel %vm168, %v80, 0
    %175 = vmatprep.subr.mxu0 0.0
    %176 = vmatpush1.msra.mxu0 %v81
    %177 = vmatprep.subr.mxu0 0.0
    %178 = vmatpush1.msra.mxu0 %v82
    %179 = vmatprep.subr.mxu0 0.0
    %180 = vmatpush1.msra.mxu0 0.0
    %181 = vmatprep.subr.mxu0 0.0
    %182 = vmatpush1.msra.mxu0 0.0
    %183 = vmatprep.subr.mxu0 0.0
    %184 = vmatpush1.msra.mxu0 0.0
    %185 = vmatprep.subr.mxu0 0.0
    %186 = vmatpush1.msra.mxu0 0.0
    %187 = vmatprep.subr.mxu0 0.0
    %188 = vmatpush1.msra.mxu0 0.0
    %189 = vmatprep.subr.mxu0 0.0
    %190 = vmatpush1.msra.mxu0 0.0
    %191 = vmatprep.subr.mxu0 0.0
    %192 = vmatpush1.msra.mxu0 0.0
    %193 = vmatprep.subr.mxu0 0.0
    %194 = vmatpush1.msra.mxu0 0.0
    %195 = vmatprep.subr.mxu0 0.0
    %196 = vmatpush1.msra.mxu0 0.0
    %197 = vmatprep.subr.mxu0 0.0
    %198 = vmatpush1.msra.mxu0 0.0
    %199 = vmatprep.subr.mxu0 0.0
    %200 = vmatpush1.msra.mxu0 0.0
    %201 = vmatprep.subr.mxu0 0.0
    %202 = vmatpush1.msra.mxu0 0.0
    %203 = vmatprep.subr.mxu0 0.0
    %204 = vmatpush1.msra.mxu0 0.0
    %205 = vmatprep.subr.mxu0 0.0
    %206 = vmatpush1.msra.mxu0 0.0
    %207 = vmatprep.subr.mxu0 0.0
    %208 = vmatpush1.msra.mxu0 0.0
    %209 = vmatprep.subr.mxu0 0.0
    %210 = vmatpush1.msra.mxu0 0.0
    %211 = vmatprep.subr.mxu0 0.0
    %212 = vmatpush1.msra.mxu0 0.0
    %213 = vmatprep.subr.mxu0 0.0
    %214 = vmatpush1.msra.mxu0 0.0
    %215 = vmatprep.subr.mxu0 0.0
    %216 = vmatpush1.msra.mxu0 0.0
    %217 = vmatprep.subr.mxu0 0.0
    %218 = vmatpush1.msra.mxu0 0.0
    %219 = vmatprep.subr.mxu0 0.0
    %220 = vmatpush1.msra.mxu0 0.0
    %221 = vmatprep.subr.mxu0 0.0
    %222 = vmatpush1.msra.mxu0 0.0
    %223 = vmatprep.subr.mxu0 0.0
    %224 = vmatpush1.msra.mxu0 0.0
    %225 = vmatprep.subr.mxu0 0.0
    %226 = vmatpush1.msra.mxu0 0.0
    %227 = vmatprep.subr.mxu0 0.0
    %228 = vmatpush1.msra.mxu0 0.0
    %229 = vmatprep.subr.mxu0 0.0
    %230 = vmatpush1.msra.mxu0 0.0
    %231 = vmatprep.subr.mxu0 0.0
    %232 = vmatpush1.msra.mxu0 0.0
    %233 = vmatprep.subr.mxu0 0.0
    %234 = vmatpush1.msra.mxu0 0.0
    %235 = vmatprep.subr.mxu0 0.0
    %236 = vmatpush1.msra.mxu0 0.0
    %237 = vmatprep.subr.mxu0 0.0
    %238 = vmatpush1.msra.mxu0 0.0
    %239 = vmatprep.mubr.f32.mxu0 0.0
    %240 = vmatmul.mubr.f32.gmra.mrb[0].mxu0 %v170
    %v241 = vpop.f32.mrb[0].mxu0
    %v242 = vadd.f32 %v160, %v241
    %v243 = vpop.f32.mrb[0].mxu0
    %244 = vmatprep.mubr.f32.mxu0 0.0
    %245 = vmatmul.mubr.f32.gmra.mrb[0].mxu0 %v173
    %v246 = vpop.f32.mrb[0].mxu0
    %v247 = vadd.f32 %v165, %v246
    %v248 = vpop.f32.mrb[0].mxu0
    %249 = vdwg.mxu0
    %v250 = vld [vmem:[%s4] sm:$0x1]
    %v252 = vlaneseq
    %v253 = vshrl.u32 %v252, 7
    %v254 = vsub.s32 0, %v253
    %v255 = vrot.slane %v250, %v254
    %v257 = vadd.f32 %v242, %v255
    %v258 = vadd.f32 %v247, %v255
    %v259 = vmax.f32 %v257, 0.0
    %v260 = vmax.f32 %v258, 0.0
    %v261 = vld [vmem:[#allocation6] sm:$0xff]
    %v262 = vld [vmem:[#allocation6 + $0x8] sm:$0xff]
    %v263 = vld [vmem:[#allocation6 + $0x10] sm:$0xff]
    %v264 = vld [vmem:[#allocation6 + $0x18] sm:$0xff]
    %v265 = vld [vmem:[#allocation6 + $0x20] sm:$0xff]
    %v266 = vld [vmem:[#allocation6 + $0x28] sm:$0xff]
    %v267 = vld [vmem:[#allocation6 + $0x30] sm:$0xff]
    %v268 = vld [vmem:[#allocation6 + $0x38] sm:$0xff]
    %v269 = vld [vmem:[#allocation6 + $0x40] sm:$0xff]
    %v270 = vld [vmem:[#allocation6 + $0x48] sm:$0xff]
    %v271 = vld [vmem:[#allocation6 + $0x50] sm:$0xff]
    %v272 = vld [vmem:[#allocation6 + $0x58] sm:$0xff]
    %v273 = vld [vmem:[#allocation6 + $0x60] sm:$0xff]
    %v274 = vld [vmem:[#allocation6 + $0x68] sm:$0xff]
    %v275 = vld [vmem:[#allocation6 + $0x70] sm:$0xff]
    %v276 = vld [vmem:[#allocation6 + $0x78] sm:$0xff]
    %v277 = vld [vmem:[%s6] sm:$0x1]
    %v279 = vlaneseq
    %v280 = vshrl.u32 %v279, 7
    %v281 = vsub.s32 0, %v280
    %v282 = vrot.slane %v277, %v281
    %284 = vmatprep.subr.mxu0 0.0
    %285 = vmatpush1.msra.mxu0 %v261
    %286 = vmatprep.subr.mxu0 0.0
    %287 = vmatpush1.msra.mxu0 %v262
    %288 = vmatprep.subr.mxu0 0.0
    %289 = vmatpush1.msra.mxu0 %v263
    %290 = vmatprep.subr.mxu0 0.0
    %291 = vmatpush1.msra.mxu0 %v264
    %292 = vmatprep.subr.mxu0 0.0
    %293 = vmatpush1.msra.mxu0 %v265
    %294 = vmatprep.subr.mxu0 0.0
    %295 = vmatpush1.msra.mxu0 %v266
    %296 = vmatprep.subr.mxu0 0.0
    %297 = vmatpush1.msra.mxu0 %v267
    %298 = vmatprep.subr.mxu0 0.0
    %299 = vmatpush1.msra.mxu0 %v268
    %300 = vmatprep.subr.mxu0 0.0
    %301 = vmatpush1.msra.mxu0 %v269
    %302 = vmatprep.subr.mxu0 0.0
    %303 = vmatpush1.msra.mxu0 %v270
    %304 = vmatprep.subr.mxu0 0.0
    %305 = vmatpush1.msra.mxu0 %v271
    %306 = vmatprep.subr.mxu0 0.0
    %307 = vmatpush1.msra.mxu0 %v272
    %308 = vmatprep.subr.mxu0 0.0
    %309 = vmatpush1.msra.mxu0 %v273
    %310 = vmatprep.subr.mxu0 0.0
    %311 = vmatpush1.msra.mxu0 %v274
    %312 = vmatprep.subr.mxu0 0.0
    %313 = vmatpush1.msra.mxu0 %v275
    %314 = vmatprep.subr.mxu0 0.0
    %315 = vmatpush1.msra.mxu0 %v276
    %316 = vmatprep.subr.mxu0 0.0
    %317 = vmatpush1.msra.mxu0 0.0
    %318 = vmatprep.subr.mxu0 0.0
    %319 = vmatpush1.msra.mxu0 0.0
    %320 = vmatprep.subr.mxu0 0.0
    %321 = vmatpush1.msra.mxu0 0.0
    %322 = vmatprep.subr.mxu0 0.0
    %323 = vmatpush1.msra.mxu0 0.0
    %324 = vmatprep.subr.mxu0 0.0
    %325 = vmatpush1.msra.mxu0 0.0
    %326 = vmatprep.subr.mxu0 0.0
    %327 = vmatpush1.msra.mxu0 0.0
    %328 = vmatprep.subr.mxu0 0.0
    %329 = vmatpush1.msra.mxu0 0.0
    %330 = vmatprep.subr.mxu0 0.0
    %331 = vmatpush1.msra.mxu0 0.0
    %332 = vmatprep.subr.mxu0 0.0
    %333 = vmatpush1.msra.mxu0 0.0
    %334 = vmatprep.subr.mxu0 0.0
    %335 = vmatpush1.msra.mxu0 0.0
    %336 = vmatprep.subr.mxu0 0.0
    %337 = vmatpush1.msra.mxu0 0.0
    %338 = vmatprep.subr.mxu0 0.0
    %339 = vmatpush1.msra.mxu0 0.0
    %340 = vmatprep.subr.mxu0 0.0
    %341 = vmatpush1.msra.mxu0 0.0
    %342 = vmatprep.subr.mxu0 0.0
    %343 = vmatpush1.msra.mxu0 0.0
    %344 = vmatprep.subr.mxu0 0.0
    %345 = vmatpush1.msra.mxu0 0.0
    %346 = vmatprep.subr.mxu0 0.0
    %347 = vmatpush1.msra.mxu0 0.0
    %348 = vmatprep.mubr.f32.mxu0 0.0
    %349 = vmatmul.mubr.f32.gmra.mrb[0].mxu0 %v259
    %v350 = vpop.f32.mrb[0].mxu0
    %v351 = vadd.f32 %v282, %v350
    %v352 = vpop.f32.mrb[0].mxu0
    %353 = vmatprep.mubr.f32.mxu0 0.0
    %354 = vmatmul.mubr.f32.gmra.mrb[0].mxu0 %v260
    %v355 = vpop.f32.mrb[0].mxu0
    %v356 = vadd.f32 %v282, %v355
    %v357 = vpop.f32.mrb[0].mxu0
    %358 = vdwg.mxu0
    %v359 = vmax.f32 %v351, 0.0
    %v360 = vmax.f32 %v356, 0.0
    %v361 = vld [vmem:[#allocation8] sm:$0xff]
    %v362 = vld [vmem:[#allocation8 + $0x8] sm:$0xff]
    %v363 = vld [vmem:[#allocation8 + $0x10] sm:$0xff]
    %v364 = vld [vmem:[#allocation8 + $0x18] sm:$0xff]
    %v365 = vld [vmem:[#allocation8 + $0x20] sm:$0xff]
    %v366 = vld [vmem:[#allocation8 + $0x28] sm:$0xff]
    %v367 = vld [vmem:[#allocation8 + $0x30] sm:$0xff]
    %v368 = vld [vmem:[#allocation8 + $0x38] sm:$0xff]
    %v369 = vld [vmem:[#allocation8 + $0x40] sm:$0xff]
    %v370 = vld [vmem:[#allocation8 + $0x48] sm:$0xff]
    %v371 = vld [vmem:[#allocation8 + $0x50] sm:$0xff]
    %v372 = vld [vmem:[#allocation8 + $0x58] sm:$0xff]
    %v373 = vld [vmem:[#allocation8 + $0x60] sm:$0xff]
    %v374 = vld [vmem:[#allocation8 + $0x68] sm:$0xff]
    %v375 = vld [vmem:[#allocation8 + $0x70] sm:$0xff]
    %v376 = vld [vmem:[#allocation8 + $0x78] sm:$0xff]
    %v377 = vld [vmem:[%s8] sm:$0x1]
    %v379 = vlaneseq
    %v380 = vshrl.u32 %v379, 7
    %v381 = vsub.s32 0, %v380
    %v382 = vrot.slane %v377, %v381
    %384 = vmatprep.subr.mxu0 0.0
    %385 = vmatpush1.msra.mxu0 %v361
    %386 = vmatprep.subr.mxu0 0.0
    %387 = vmatpush1.msra.mxu0 %v362
    %388 = vmatprep.subr.mxu0 0.0
    %389 = vmatpush1.msra.mxu0 %v363
    %390 = vmatprep.subr.mxu0 0.0
    %391 = vmatpush1.msra.mxu0 %v364
    %392 = vmatprep.subr.mxu0 0.0
    %393 = vmatpush1.msra.mxu0 %v365
    %394 = vmatprep.subr.mxu0 0.0
    %395 = vmatpush1.msra.mxu0 %v366
    %396 = vmatprep.subr.mxu0 0.0
    %397 = vmatpush1.msra.mxu0 %v367
    %398 = vmatprep.subr.mxu0 0.0
    %399 = vmatpush1.msra.mxu0 %v368
    %400 = vmatprep.subr.mxu0 0.0
    %401 = vmatpush1.msra.mxu0 %v369
    %402 = vmatprep.subr.mxu0 0.0
    %403 = vmatpush1.msra.mxu0 %v370
    %404 = vmatprep.subr.mxu0 0.0
    %405 = vmatpush1.msra.mxu0 %v371
    %406 = vmatprep.subr.mxu0 0.0
    %407 = vmatpush1.msra.mxu0 %v372
    %408 = vmatprep.subr.mxu0 0.0
    %409 = vmatpush1.msra.mxu0 %v373
    %410 = vmatprep.subr.mxu0 0.0
    %411 = vmatpush1.msra.mxu0 %v374
    %412 = vmatprep.subr.mxu0 0.0
    %413 = vmatpush1.msra.mxu0 %v375
    %414 = vmatprep.subr.mxu0 0.0
    %415 = vmatpush1.msra.mxu0 %v376
    %416 = vmatprep.subr.mxu0 0.0
    %417 = vmatpush1.msra.mxu0 0.0
    %418 = vmatprep.subr.mxu0 0.0
    %419 = vmatpush1.msra.mxu0 0.0
    %420 = vmatprep.subr.mxu0 0.0
    %421 = vmatpush1.msra.mxu0 0.0
    %422 = vmatprep.subr.mxu0 0.0
    %423 = vmatpush1.msra.mxu0 0.0
    %424 = vmatprep.subr.mxu0 0.0
    %425 = vmatpush1.msra.mxu0 0.0
    %426 = vmatprep.subr.mxu0 0.0
    %427 = vmatpush1.msra.mxu0 0.0
    %428 = vmatprep.subr.mxu0 0.0
    %429 = vmatpush1.msra.mxu0 0.0
    %430 = vmatprep.subr.mxu0 0.0
    %431 = vmatpush1.msra.mxu0 0.0
    %432 = vmatprep.subr.mxu0 0.0
    %433 = vmatpush1.msra.mxu0 0.0
    %434 = vmatprep.subr.mxu0 0.0
    %435 = vmatpush1.msra.mxu0 0.0
    %436 = vmatprep.subr.mxu0 0.0
    %437 = vmatpush1.msra.mxu0 0.0
    %438 = vmatprep.subr.mxu0 0.0
    %439 = vmatpush1.msra.mxu0 0.0
    %440 = vmatprep.subr.mxu0 0.0
    %441 = vmatpush1.msra.mxu0 0.0
    %442 = vmatprep.subr.mxu0 0.0
    %443 = vmatpush1.msra.mxu0 0.0
    %444 = vmatprep.subr.mxu0 0.0
    %445 = vmatpush1.msra.mxu0 0.0
    %446 = vmatprep.subr.mxu0 0.0
    %447 = vmatpush1.msra.mxu0 0.0
    %448 = vmatprep.mubr.f32.mxu0 0.0
    %449 = vmatmul.mubr.f32.gmra.mrb[0].mxu0 %v359
    %v450 = vpop.f32.mrb[0].mxu0
    %v451 = vadd.f32 %v382, %v450
    %v452 = vpop.f32.mrb[0].mxu0
    %453 = vmatprep.mubr.f32.mxu0 0.0
    %454 = vmatmul.mubr.f32.gmra.mrb[0].mxu0 %v360
    %v455 = vpop.f32.mrb[0].mxu0
    %v456 = vadd.f32 %v382, %v455
    %v457 = vpop.f32.mrb[0].mxu0
    %458 = vdwg.mxu0
    %v459 = vmax.f32 %v451, 0.0
    %v460 = vmax.f32 %v456, 0.0
    %v461 = vld [vmem:[%s9] sm:$0xff]
    %462 = vmatprep.subr.mxu0 0.0
    %463 = vmatpush1.xpose.msra.mxu0 %v459
    %464 = vmatprep.subr.mxu0 0.0
    %465 = vmatpush1.xpose.msra.mxu0 %v460
    %466 = vmatprep.subr.mxu0 0.0
    %467 = vmatpush1.xpose.msra.mxu0 0.0
    %468 = vmatprep.subr.mxu0 0.0
    %469 = vmatpush1.xpose.msra.mxu0 0.0
    %470 = vmatprep.subr.mxu0 0.0
    %471 = vmatpush1.xpose.msra.mxu0 0.0
    %472 = vmatprep.subr.mxu0 0.0
    %473 = vmatpush1.xpose.msra.mxu0 0.0
    %474 = vmatprep.subr.mxu0 0.0
    %475 = vmatpush1.xpose.msra.mxu0 0.0
    %476 = vmatprep.subr.mxu0 0.0
    %477 = vmatpush1.xpose.msra.mxu0 0.0
    %478 = vmatprep.subr.mxu0 0.0
    %479 = vmatpush1.xpose.msra.mxu0 0.0
    %480 = vmatprep.subr.mxu0 0.0
    %481 = vmatpush1.xpose.msra.mxu0 0.0
    %482 = vmatprep.subr.mxu0 0.0
    %483 = vmatpush1.xpose.msra.mxu0 0.0
    %484 = vmatprep.subr.mxu0 0.0
    %485 = vmatpush1.xpose.msra.mxu0 0.0
    %486 = vmatprep.subr.mxu0 0.0
    %487 = vmatpush1.xpose.msra.mxu0 0.0
    %488 = vmatprep.subr.mxu0 0.0
    %489 = vmatpush1.xpose.msra.mxu0 0.0
    %490 = vmatprep.subr.mxu0 0.0
    %491 = vmatpush1.xpose.msra.mxu0 0.0
    %492 = vmatprep.subr.mxu0 0.0
    %493 = vmatpush1.xpose.msra.mxu0 0.0
    %494 = vmatprep.subr.mxu0 0.0
    %495 = vmatpush1.xpose.msra.mxu0 0.0
    %496 = vmatprep.subr.mxu0 0.0
    %497 = vmatpush1.xpose.msra.mxu0 0.0
    %498 = vmatprep.subr.mxu0 0.0
    %499 = vmatpush1.xpose.msra.mxu0 0.0
    %500 = vmatprep.subr.mxu0 0.0
    %501 = vmatpush1.xpose.msra.mxu0 0.0
    %502 = vmatprep.subr.mxu0 0.0
    %503 = vmatpush1.xpose.msra.mxu0 0.0
    %504 = vmatprep.subr.mxu0 0.0
    %505 = vmatpush1.xpose.msra.mxu0 0.0
    %506 = vmatprep.subr.mxu0 0.0
    %507 = vmatpush1.xpose.msra.mxu0 0.0
    %508 = vmatprep.subr.mxu0 0.0
    %509 = vmatpush1.xpose.msra.mxu0 0.0
    %510 = vmatprep.subr.mxu0 0.0
    %511 = vmatpush1.xpose.msra.mxu0 0.0
    %512 = vmatprep.subr.mxu0 0.0
    %513 = vmatpush1.xpose.msra.mxu0 0.0
    %514 = vmatprep.subr.mxu0 0.0
    %515 = vmatpush1.xpose.msra.mxu0 0.0
    %516 = vmatprep.subr.mxu0 0.0
    %517 = vmatpush1.xpose.msra.mxu0 0.0
    %518 = vmatprep.subr.mxu0 0.0
    %519 = vmatpush1.xpose.msra.mxu0 0.0
    %520 = vmatprep.subr.mxu0 0.0
    %521 = vmatpush1.xpose.msra.mxu0 0.0
    %522 = vmatprep.subr.mxu0 0.0
    %523 = vmatpush1.xpose.msra.mxu0 0.0
    %524 = vmatprep.subr.mxu0 0.0
    %525 = vmatpush1.xpose.msra.mxu0 0.0
    %526 = vmatprep.mubr.f32.mxu0 0.0
    %527 = vmatmul.mubr.f32.gmra.mrb[0].mxu0 %v461
    %v528 = vpop.f32.mrb[0].mxu0
    %v529 = vadd.f32 0.0, %v528
    %v530 = vpop.f32.mrb[0].mxu0
    %531 = vdwg.mxu0
    %s532 = sld [smem:[#allocation2]]
    %v533 = vstv %s532
    %v534 = vadd.f32 %v529, %v533
    %vm535 = vcmask 122880
    %536 = vst.msk [vmem:[#allocation9] sm:$0x1] %vm535, %v534
    // Predicated region
    $region58: #{tpu_custom_call.1} parent=1 // pred_check
      _
    $region59: #{tpu_custom_call.1} parent=1 // pred_check_branch
      %538 = sbr.rel (0) target = $region61
    $region60: #{tpu_custom_call.1} parent=1 // pred_region
      %s540 = ssub.s32 16, 16
      %541 = vsyncadd [#allocation5], %s540
      %s543 = sshll.u32 [#allocation9], 4
      %s544 = int_to_ptr.vmem [resolvable:$true] %s543
      %546 = dma.vmem_to_hbm [thread:$0]  %s544, 16, %s11, [#allocation5]
    $region61: #{tpu_custom_call.1} parent=1 // pred_fallthru
      _
    // Predicated region
    $region62: #{tpu_custom_call.1} parent=1 // pred_check
      _
    $region63: #{tpu_custom_call.1} parent=1 // pred_check_branch
      %548 = sbr.rel (0) target = $region65
    $region64: #{tpu_custom_call.1} parent=1 // pred_region
      %549 = dma.done [#allocation5], 16
    $region65: #{tpu_custom_call.1} parent=1 // pred_fallthru
      _
    %550 = vsyncpa [#allocation4], 1
    %551 = vsyncpa [#allocation7], 1
    %552 = vsyncpa [#allocation5], 1

</llo_original>
